<compile_context>
chip_gen: v6e
topology: v6e:2x2x1
jax: 0.10.0
libtpu: 0.0.40
codegen_flags: <defaults>
</compile_context>

<pallas_src>
import math

import jax
import jax.numpy as jnp
from jax.experimental import pallas as pl
from jax.experimental.pallas import tpu as pltpu


def _build_pe_table(d_model: int, max_len: int = 5000) -> jnp.ndarray:
    """Sin/cos positional-encoding table, shape (max_len, d_model).

    Mirrors the PyTorch __init__ exactly (parameter setup — plain JAX).
    """
    assert d_model % 2 == 0, "reference PositionalEncoding assumes even d_model"
    position = jnp.arange(0, max_len, dtype=jnp.float32)[:, None]                # (max_len, 1)
    div_term = jnp.exp(
        jnp.arange(0, d_model, 2, dtype=jnp.float32) * (-math.log(10000.0) / d_model)
    )                                                                            # (d_model/2,)
    angles = position * div_term                                                 # (max_len, d_model/2)
    pe = jnp.zeros((max_len, d_model), dtype=jnp.float32)
    pe = pe.at[:, 0::2].set(jnp.sin(angles))
    pe = pe.at[:, 1::2].set(jnp.cos(angles))
    return pe


def _add_pe_kernel(x_ref, pe_ref, o_ref):
    # All refs are 2-D (TR, TC): the leading batch dim of x / out is squeezed by
    # the BlockSpec (None block dim), so this is a pure streaming add on the VPU —
    # strictly HBM-bandwidth-bound.  Store cast keeps it dtype-robust (bf16 etc.).
    o_ref[...] = (x_ref[...] + pe_ref[...]).astype(o_ref.dtype)


def _vmem_budget():
    """Per-generation (target_tile_bytes, vmem_limit_bytes).

    v5e/v6e (128 MiB physical VMEM): ~8 MiB per buffer, 64 MiB scoped limit
      (3 streams x 2 buffers x 8 MiB = 48 MiB + headroom).
    v7x-class (64 MiB physical VMEM): ~4 MiB per buffer, 48 MiB scoped limit.
    """
    try:
        vmem_cap = pltpu.get_tpu_info().vmem_capacity_bytes
    except Exception:
        vmem_cap = 128 * 1024 * 1024
    if vmem_cap <= 64 * 1024 * 1024:
        return 4 * 1024 * 1024, 48 * 1024 * 1024
    return 8 * 1024 * 1024, 64 * 1024 * 1024


def _lane_dense_view(seq_len: int, d_model: int):
    """Choose a 2-D view (R, C) of the per-batch (seq_len, d_model) slab with a
    lane-dense last dim (multiple of 128) whenever possible.

    Reshaping x[b] and pe identically (row-major) preserves the elementwise
    correspondence, so the add is unchanged — this only turns masked vst.msk
    partial stores into unmasked lane-dense stores.
    """
    if d_model % 128 == 0:
        return seq_len, d_model
    total = seq_len * d_model
    for c in (1024, 512, 256, 128):
        if total % c == 0:
            return total // c, c
    return seq_len, d_model  # fallback: not lane-dense, but still correct


def _pick_tiles(R: int, C: int, bytes_per_elem: int, target_tile_bytes: int):
    """Tile (R, C) into (TR, TC) blocks.

    TC: multiple of 128 (<= 1024) or the full extent.  TR: multiple of 8 (or the
    full extent), sized so one buffer is ~<= target_tile_bytes.  Partial edge
    blocks (when TR/TC don't divide R/C) are handled by Pallas masking.
    """
    TC = min(C, 1024) if C % 128 == 0 else C
    budget_rows = max(8, target_tile_bytes // (bytes_per_elem * TC))
    if R <= 8:
        TR = R
    else:
        TR = min(R, budget_rows)
        TR = max(8, (TR // 8) * 8)
    return TR, TC


def positional_encoding_forward(x: jnp.ndarray, pe_full: jnp.ndarray,
                                *, alias_x_to_output: bool = False) -> jnp.ndarray:
    """x: (batch, seq_len, d_model); pe_full: (max_len, d_model).  Returns x + pe[:seq_len]."""
    batch, seq_len, d_model = x.shape
    assert pe_full.shape[1] == d_model and pe_full.shape[0] >= seq_len

    target_tile_bytes, vmem_limit_bytes = _vmem_budget()

    # Cast pe to x's dtype at the wrapper boundary: avoids shipping f32 pe when x
    # is bf16 (halves pe traffic) and keeps the in-kernel store dtype-consistent.
    pe_full = pe_full.astype(x.dtype)

    if d_model % 128 == 0:
        # Natively lane-dense: skip the slice AND the reshape.  pe_full is
        # windowed directly by the index_map, so no extra HBM copy of the sliced
        # pe slab is materialized before the kernel runs.
        R, C = seq_len, d_model
        x_view = x
        pe_view = pe_full
    else:
        # Lane-dense row-major view of the (seq_len, d_model) slab.  The reshape
        # needs the slab sliced to seq_len first so x[b] and pe stay in exact
        # row-major correspondence.
        pe = pe_full[:seq_len, :]
        R, C = _lane_dense_view(seq_len, d_model)
        x_view = x.reshape(batch, R, C)    # row-major reshape: layout-only
        pe_view = pe.reshape(R, C)

    TR, TC = _pick_tiles(R, C, x.dtype.itemsize, target_tile_bytes)

    # Batch innermost so the pe block index is unchanged across consecutive grid
    # steps -> Pallas does not re-DMA the pe tile per batch element.
    grid = (pl.cdiv(R, TR), pl.cdiv(C, TC), batch)

    extra_kwargs = {}
    if alias_x_to_output:
        # In-place add: output reuses x's HBM buffer.  Memory-footprint knob only
        # (bytes moved are unchanged); the reshape in the non-lane-dense path may
        # defeat the aliasing — verify before enabling.
        extra_kwargs["input_output_aliases"] = {0: 0}

    out = pl.pallas_call(
        _add_pe_kernel,
        out_shape=jax.ShapeDtypeStruct((batch, R, C), x.dtype),
        grid=grid,
        in_specs=[
            # x: batch dim squeezed (None) -> kernel sees 2-D (TR, TC) tiles.
            pl.BlockSpec((None, TR, TC), lambda i, j, b: (b, i, j)),
            # pe: broadcast over batch -> block index ignores b (reused tile).
            pl.BlockSpec((TR, TC), lambda i, j, b: (i, j)),
        ],
        out_specs=pl.BlockSpec((None, TR, TC), lambda i, j, b: (b, i, j)),
        compiler_params=pltpu.CompilerParams(
            # row/col tiles write disjoint output blocks -> "parallel" (megacore
            # shardable).  Batch kept innermost + "arbitrary" so its sequential
            # order preserves the pe-block reuse.
            dimension_semantics=("parallel", "parallel", "arbitrary"),
            vmem_limit_bytes=vmem_limit_bytes,
        ),
        **extra_kwargs,
    )(x_view, pe_view)

    # Optional ~2x traffic win: run the whole thing in bf16 at the caller boundary
    # if downstream tolerates it (min sublane tile becomes 16).  Kept f32 in the
    # demo to match the PyTorch module bit-for-bit semantics.
    return out.reshape(batch, seq_len, d_model)


if __name__ == "__main__":
    d_model = 64
    batch, seq_len = 2, 8
    max_len = 128  # small deterministic table; identical semantics to max_len=5000 for seq_len<=128

    key = jax.random.PRNGKey(0)
    x = jax.random.normal(key, (batch, seq_len, d_model), dtype=jnp.float32)

    pe_full = _build_pe_table(d_model, max_len)

    out = positional_encoding_forward(x, pe_full)
    out = jax.block_until_ready(out)

    # Reference check in plain JAX (same math as the PyTorch forward).
    ref = x + pe_full[None, :seq_len, :]
    assert out.shape == (batch, seq_len, d_model)
    assert jnp.allclose(out, ref, atol=1e-6), "mismatch vs reference"

    print("KERNEL_OK")
</pallas_src>

<mosaic_0001>
module attributes {stable_mosaic.version = 11 : i64} {
  func.func @_add_pe_kernel(%arg0: i32, %arg1: i32, %arg2: i32, %arg3: memref<1x1x512xf32, #tpu.memory_space<vmem>>, %arg4: memref<1x512xf32, #tpu.memory_space<vmem>>, %arg5: memref<1x1x512xf32, #tpu.memory_space<vmem>>) attributes {dimension_semantics = [#tpu.dimension_semantics<parallel>, #tpu.dimension_semantics<parallel>, #tpu.dimension_semantics<arbitrary>], iteration_bounds = array<i64: 1, 1, 2>, scalar_prefetch = 0 : i64, scratch_operands = 0 : i64, tpu.core_type = #tpu.core_type<tc>, window_params = [{transform_indices = @transform_0, window_bounds = array<i64: 1, 1, 512>}, {transform_indices = @transform_1, window_bounds = array<i64: 1, 512>}, {transform_indices = @transform_2, window_bounds = array<i64: 1, 1, 512>}]} {
    %c0 = arith.constant 0 : index
    %c0_0 = arith.constant 0 : index
    %c0_1 = arith.constant 0 : index
    %0 = vector.load %arg3[%c0, %c0_0, %c0_1] : memref<1x1x512xf32, #tpu.memory_space<vmem>>, vector<1x1x512xf32>
    %1 = vector.shape_cast %0 : vector<1x1x512xf32> to vector<1x512xf32>
    %c0_2 = arith.constant 0 : index
    %c0_3 = arith.constant 0 : index
    %2 = vector.load %arg4[%c0_2, %c0_3] : memref<1x512xf32, #tpu.memory_space<vmem>>, vector<1x512xf32>
    %3 = arith.addf %1, %2 : vector<1x512xf32>
    %c0_4 = arith.constant 0 : index
    %c0_5 = arith.constant 0 : index
    %c0_6 = arith.constant 0 : index
    %4 = vector.load %arg5[%c0_4, %c0_5, %c0_6] : memref<1x1x512xf32, #tpu.memory_space<vmem>>, vector<1x1x512xf32>
    %5 = vector.shape_cast %4 : vector<1x1x512xf32> to vector<1x512xf32>
    %6 = vector.shape_cast %3 : vector<1x512xf32> to vector<1x1x512xf32>
    tpu.vector_store %arg5[%c0_4, %c0_5, %c0_6], %6 {strides = array<i32>} : memref<1x1x512xf32, #tpu.memory_space<vmem>>, vector<1x1x512xf32>,
    return
  }
  func.func @transform_0(%arg0: i32, %arg1: i32, %arg2: i32) -> (i32, i32, i32) {
    %c0_i32 = arith.constant 0 : i32
    return %arg2, %arg0, %arg1 : i32, i32, i32
  }
  func.func @transform_1(%arg0: i32, %arg1: i32, %arg2: i32) -> (i32, i32) {
    %c0_i32 = arith.constant 0 : i32
    return %arg0, %arg1 : i32, i32
  }
  func.func @transform_2(%arg0: i32, %arg1: i32, %arg2: i32) -> (i32, i32, i32) {
    %c0_i32 = arith.constant 0 : i32
    return %arg2, %arg0, %arg1 : i32, i32, i32
  }
}

</mosaic_0001>

<llo_original>
// kernel: tpu_custom_call.1
$region0: #{tpu_custom_call.1}
  #allocation0 [shape = 'u32[]', space=smem, size = 0x4, offset = 0x4, fixed_abs, tag = 'smem constant byte address 0x4 - core index']
  #allocation1 [shape = 'u32[144,128]{1,0:T(1,128)}', space=vmem, size = 0x12000, scoped, tag = 'internal scratch']
  %s0 = inlined_call_operand.hbm [shape: f32[2,1,512], index: 0, kind: input, shape index: {}]
  %s1 = inlined_call_operand.hbm [shape: f32[1,512], index: 1, kind: input, shape index: {}]
  %s2 = inlined_call_operand.hbm [shape: f32[2,1,512], index: 2, kind: output, shape index: {}]
  %s3 = sld [smem:[#allocation0]]
  $region49: #{tpu_custom_call.1} parent=0
    _
  %s5 = ssub.s32 1, %s3
  %s6 = scalar_select 0, %s5, %s3
  $region1: #{tpu_custom_call.1} parent=0
    #allocation2 [shape = 'u8[4096]{0}', space=vmem, size = 0x1000, scoped, tag = 'input window, operand 0']
    #allocation3 [shape = 's32[2]{0}', space=sflag, size = 0x8, scoped, tag = 'scoped memory for tpu_custom_call.1']
    #allocation4 [shape = 's32[2]{0}', space=sflag, size = 0x8, scoped, tag = 'scoped memory for tpu_custom_call.1']
    #allocation5 [shape = 'u8[2048]{0}', space=vmem, size = 0x800, scoped, tag = 'input window, operand 1, single buffered']
    #allocation6 [shape = 's32[1]{0}', space=sflag, size = 0x4, scoped, tag = 'scoped memory for tpu_custom_call.1']
    #allocation7 [shape = 'u8[4096]{0}', space=vmem, size = 0x1000, scoped, tag = 'output window, operand 0']
    %7 = vsyncpa [#allocation3], 0
    %s8 = scalar_lea.sflag [#allocation3], 1
    %9 = vsyncpa %s8, 0
    %10 = vsyncpa [#allocation6], 0
    %11 = vsyncpa [#allocation4], 0
    %s12 = scalar_lea.sflag [#allocation4], 1
    %13 = vsyncpa %s12, 0
    loop: start=0, step=1, limit=4
    $region2: #{tpu_custom_call.1} parent=1 // loop_pre_header
      _
    $region3: #{tpu_custom_call.1} parent=1 // loop_header
      %s15 = sphi 0, %s19
      %p16 = scmp.ge.s32.totalorder %s15, 4
      %s22 = sphi 0, %s41
      %s23 = sphi 0, %s37
      %s24 = sphi 0, %s33
      %s25 = sphi 0, %s22
      %s26 = sphi 0, %s23
      %s27 = sphi 0, %s24
      %s28 = sphi 0, %s25
      %s29 = sphi 0, %s26
      %s30 = sphi 0, %s27
      %s48 = sphi 0, %s50
      %s51 = sphi 0, %s48
      %s52 = sphi 0, %s51
      %s68 = sphi 0, %s52
      %s76 = sphi 0, %s78
      %s79 = sphi 0, %s76
      %s80 = sphi 0, %s79
      %s96 = sphi 0, %s80
      %s106 = sphi 0, %s108
      %s109 = sphi 0, %s106
      %s110 = sphi 0, %s109
      %s126 = sphi 0, %s110
    $region4: #{tpu_custom_call.1} parent=1 // loop_header_branch
      %18 = sbr.rel (%p16) target = $region8
    $region5: #{tpu_custom_call.1} parent=1 // loop_body
      %s20 = ssub.s32 %s15, 1
      %s21 = ssub.s32 %s15, 2
      %s31 = sadd.s32 1, %s24
      %p32 = scmp.ge.s32.totalorder %s31, 2
      %s33 = scalar_select %p32, 0, %s31
      %s34 = sadd.s32 1, %s23
      %s35 = scalar_select %p32, %s34, %s23
      %p36 = scmp.ge.s32.totalorder %s35, 1
      %s37 = scalar_select %p36, 0, %s35
      %s38 = sadd.s32 1, %s22
      %s39 = scalar_select %p36, %s38, %s22
      %p40 = scmp.ge.s32.totalorder %s39, 1
      %s41 = scalar_select %p40, 0, %s39
      %s42 = ssub.s32 %s24, %s33
      %s43 = ssub.s32 %s22, %s41
      %s44 = sor.u32 %s42, %s43
      %s45 = ssub.s32 %s23, %s37
      %s46 = sor.u32 %s44, %s45
      %p47 = scmp.eq.s32.totalorder %s46, 0
      %s49 = sadd.s32 %s48, 1
      %s50 = scalar_select %p47, %s48, %s49
      %p53 = pneg %p47
      %p54 = scmp.eq.s32.totalorder %s15, 1
      %p55 = por %p53, %p54
      %p56 = scmp.ne.s32.totalorder %s48, %s51
      %p57 = scmp.eq.s32.totalorder %s15, 0
      %p58 = por %p56, %p57
      %p59 = scmp.ne.s32.totalorder %s48, %s51
      %p60 = scmp.eq.s32.totalorder %s20, 1
      %p61 = por %p59, %p60
      %p62 = scmp.ne.s32.totalorder %s51, %s52
      %p63 = scmp.eq.s32.totalorder %s20, 0
      %p64 = por %p62, %p63
      %p65 = scmp.ne.s32.totalorder %s51, %s52
      %p66 = scmp.eq.s32.totalorder %s21, 1
      %p67 = por %p65, %p66
      %p69 = scmp.ne.s32.totalorder %s52, %s68
      %p70 = scmp.eq.s32.totalorder %s21, 0
      %p71 = por %p69, %p70
      %s72 = ssub.s32 %s22, %s41
      %s73 = ssub.s32 %s23, %s37
      %s74 = sor.u32 %s72, %s73
      %p75 = scmp.eq.s32.totalorder %s74, 0
      %s77 = sadd.s32 %s76, 1
      %s78 = scalar_select %p75, %s76, %s77
      %p81 = pneg %p75
      %p82 = scmp.eq.s32.totalorder %s15, 1
      %p83 = por %p81, %p82
      %p84 = scmp.ne.s32.totalorder %s76, %s79
      %p85 = scmp.eq.s32.totalorder %s15, 0
      %p86 = por %p84, %p85
      %p87 = scmp.ne.s32.totalorder %s76, %s79
      %p88 = scmp.eq.s32.totalorder %s20, 1
      %p89 = por %p87, %p88
      %p90 = scmp.ne.s32.totalorder %s79, %s80
      %p91 = scmp.eq.s32.totalorder %s20, 0
      %p92 = por %p90, %p91
      %p93 = scmp.ne.s32.totalorder %s79, %s80
      %p94 = scmp.eq.s32.totalorder %s21, 1
      %p95 = por %p93, %p94
      %p97 = scmp.ne.s32.totalorder %s80, %s96
      %p98 = scmp.eq.s32.totalorder %s21, 0
      %p99 = por %p97, %p98
      %s100 = ssub.s32 %s24, %s33
      %s101 = ssub.s32 %s22, %s41
      %s102 = sor.u32 %s100, %s101
      %s103 = ssub.s32 %s23, %s37
      %s104 = sor.u32 %s102, %s103
      %p105 = scmp.eq.s32.totalorder %s104, 0
      %s107 = sadd.s32 %s106, 1
      %s108 = scalar_select %p105, %s106, %s107
      %p111 = pneg %p105
      %p112 = scmp.eq.s32.totalorder %s15, 1
      %p113 = por %p111, %p112
      %p114 = scmp.ne.s32.totalorder %s106, %s109
      %p115 = scmp.eq.s32.totalorder %s15, 0
      %p116 = por %p114, %p115
      %p117 = scmp.ne.s32.totalorder %s106, %s109
      %p118 = scmp.eq.s32.totalorder %s20, 1
      %p119 = por %p117, %p118
      %p120 = scmp.ne.s32.totalorder %s109, %s110
      %p121 = scmp.eq.s32.totalorder %s20, 0
      %p122 = por %p120, %p121
      %p123 = scmp.ne.s32.totalorder %s109, %s110
      %p124 = scmp.eq.s32.totalorder %s21, 1
      %p125 = por %p123, %p124
      %p127 = scmp.ne.s32.totalorder %s110, %s126
      %p128 = scmp.eq.s32.totalorder %s21, 0
      %p129 = por %p127, %p128
      %p130 = scmp.le.s32.totalorder 1, %s15
      %p131 = scmp.lt.s32.totalorder %s15, 3
      %p132 = pnand %p130, %p131
      %p133 = pneg %p132
      // Predicated region
      $region9: #{tpu_custom_call.1} parent=5 // pred_check
        _
      $region10: #{tpu_custom_call.1} parent=5 // pred_check_branch
        %135 = sbr.rel (%p132) target = $region12
      $region11: #{tpu_custom_call.1} parent=5 // pred_region
        %s136 = ssub.s32 %s15, 1
        // Predicated region
        $region13: #{tpu_custom_call.1} parent=11 // pred_check
          %p137 = pneg %p92
        $region14: #{tpu_custom_call.1} parent=11 // pred_check_branch
          %139 = sbr.rel (%p137) target = $region16
        $region15: #{tpu_custom_call.1} parent=11 // pred_region
          %s140 = smul.u32 4, %s26
          %s142 = ssub.s32 64, 64
          %143 = vsyncadd [#allocation6], %s142
          %s144 = smul.addr %s25, 4
          %s145 = sadd.s32 %s140, %s144
          %s146 = smul.addr %s145, 16
          %s147 = scalar_lea.hbm %s1, %s146
          %s149 = sshll.u32 [#allocation5], 4
          %s150 = int_to_ptr.vmem [resolvable:$true] %s149
          %152 = dma.hbm_to_vmem [thread:$0]  %s147, 64, %s150, [#allocation6]
        $region16: #{tpu_custom_call.1} parent=11 // pred_fallthru
          _
      $region12: #{tpu_custom_call.1} parent=5 // pred_fallthru
        _
      %p153 = scmp.lt.s32.totalorder %s15, 2
      // Predicated region
      $region17: #{tpu_custom_call.1} parent=5 // pred_check
        %p154 = pneg %p153
      $region18: #{tpu_custom_call.1} parent=5 // pred_check_branch
        %156 = sbr.rel (%p154) target = $region20
      $region19: #{tpu_custom_call.1} parent=5 // pred_region
        // Predicated region
        $region21: #{tpu_custom_call.1} parent=19 // pred_check
          %p157 = pneg %p58
        $region22: #{tpu_custom_call.1} parent=19 // pred_check_branch
          %159 = sbr.rel (%p157) target = $region24
        $region23: #{tpu_custom_call.1} parent=19 // pred_region
          %s160 = sand.u32 %s48, 1
          %s161 = scalar_lea.sflag [#allocation3], %s160
          %s162 = sand.u32 %s48, 1
          %s163 = smul.addr %s162, 4
          %s164 = scalar_lea.vmem [#allocation2], %s163
          %s165 = smul.u32 4, %s23
          %s167 = ssub.s32 64, 64
          %168 = vsyncadd %s161, %s167
          %s169 = smul.addr %s22, 4
          %s170 = sadd.s32 %s165, %s169
          %s171 = smul.addr %s24, 4
          %s172 = sadd.s32 %s170, %s171
          %s173 = smul.addr %s172, 16
          %s174 = scalar_lea.hbm %s0, %s173
          %s176 = sshll.u32 %s164, 4
          %s177 = int_to_ptr.vmem [resolvable:$true] %s176
          %179 = dma.hbm_to_vmem [thread:$0]  %s174, 64, %s177, %s161
        $region24: #{tpu_custom_call.1} parent=19 // pred_fallthru
          _
      $region20: #{tpu_custom_call.1} parent=5 // pred_fallthru
        _
      %p180 = scmp.le.s32.totalorder 1, %s15
      %p181 = scmp.lt.s32.totalorder %s15, 3
      %p182 = pnand %p180, %p181
      %p183 = pneg %p182
      // Predicated region
      $region25: #{tpu_custom_call.1} parent=5 // pred_check
        _
      $region26: #{tpu_custom_call.1} parent=5 // pred_check_branch
        %185 = sbr.rel (%p182) target = $region28
      $region27: #{tpu_custom_call.1} parent=5 // pred_region
        %s186 = ssub.s32 %s15, 1
        %s187 = sand.u32 %s51, 1
        %s188 = scalar_lea.sflag [#allocation3], %s187
        %s189 = sand.u32 %s51, 1
        %s190 = smul.addr %s189, 4
        %s191 = scalar_lea.vmem [#allocation2], %s190
        // Predicated region
        $region29: #{tpu_custom_call.1} parent=27 // pred_check
          %p192 = pneg %p64
        $region30: #{tpu_custom_call.1} parent=27 // pred_check_branch
          %194 = sbr.rel (%p192) target = $region32
        $region31: #{tpu_custom_call.1} parent=27 // pred_region
          %195 = dma.done %s188, 64
        $region32: #{tpu_custom_call.1} parent=27 // pred_fallthru
          _
        // Predicated region
        $region33: #{tpu_custom_call.1} parent=27 // pred_check
          %p196 = pneg %p92
        $region34: #{tpu_custom_call.1} parent=27 // pred_check_branch
          %198 = sbr.rel (%p196) target = $region36
        $region35: #{tpu_custom_call.1} parent=27 // pred_region
          %199 = dma.done [#allocation6], 64
        $region36: #{tpu_custom_call.1} parent=27 // pred_fallthru
          _
        %s200 = sand.u32 %s51, 1
        %s201 = scalar_lea.sflag [#allocation3], %s200
        %s202 = sand.u32 %s51, 1
        %s203 = smul.addr %s202, 4
        %s204 = scalar_lea.vmem [#allocation2], %s203
        %p205 = pneg %p64
        %p206 = pneg %p61
        %p207 = pneg %p92
        %p208 = pneg %p89
        %p209 = pneg %p122
        %p210 = pneg %p119
        %s211 = sand.u32 %s109, 1
        %s212 = scalar_lea.sflag [#allocation4], %s211
        %s213 = sand.u32 %s109, 1
        %s214 = smul.addr %s213, 4
        %s215 = scalar_lea.vmem [#allocation7], %s214
        %s216 = smul.u32 4, %s26
        %s217 = smul.u32 4, %s26
        %s218 = smul.u32 4, %s26
        %v219 = vld [vmem:[%s191] sm:$0xf]
        %v220 = vld [vmem:[#allocation5] sm:$0xf]
        %v221 = vadd.f32 %v219, %v220
        %v222 = vlaneseq
        %vm223 = vcmp.ge.s32.totalorder %v222, 0
        %vm224 = vcmp.lt.s32.totalorder %v222, 512
        %vm225 = vmand %vm223, %vm224
        %226 = vst.msk [vmem:[%s215] sm:$0xf] %vm225, %v221
        %s227 = sand.u32 %s109, 1
        %s228 = scalar_lea.sflag [#allocation4], %s227
        %s229 = sand.u32 %s109, 1
        %s230 = smul.addr %s229, 4
        %s231 = scalar_lea.vmem [#allocation7], %s230
        // Predicated region
        $region37: #{tpu_custom_call.1} parent=27 // pred_check
          %p232 = pneg %p119
        $region38: #{tpu_custom_call.1} parent=27 // pred_check_branch
          %234 = sbr.rel (%p232) target = $region40
        $region39: #{tpu_custom_call.1} parent=27 // pred_region
          %s235 = smul.u32 4, %s26
          %s237 = ssub.s32 64, 64
          %238 = vsyncadd %s228, %s237
          %s239 = smul.addr %s25, 4
          %s240 = sadd.s32 %s235, %s239
          %s241 = smul.addr %s27, 4
          %s242 = sadd.s32 %s240, %s241
          %s243 = smul.addr %s242, 16
          %s244 = scalar_lea.hbm %s2, %s243
          %s246 = sshll.u32 %s231, 4
          %s247 = int_to_ptr.vmem [resolvable:$true] %s246
          %249 = dma.vmem_to_hbm [thread:$0]  %s247, 64, %s244, %s228
        $region40: #{tpu_custom_call.1} parent=27 // pred_fallthru
          _
      $region28: #{tpu_custom_call.1} parent=5 // pred_fallthru
        _
      %p250 = scmp.le.s32.totalorder 2, %s15
      // Predicated region
      $region41: #{tpu_custom_call.1} parent=5 // pred_check
        %p251 = pneg %p250
      $region42: #{tpu_custom_call.1} parent=5 // pred_check_branch
        %253 = sbr.rel (%p251) target = $region44
      $region43: #{tpu_custom_call.1} parent=5 // pred_region
        %s254 = ssub.s32 %s15, 2
        // Predicated region
        $region45: #{tpu_custom_call.1} parent=43 // pred_check
          %p255 = pneg %p125
        $region46: #{tpu_custom_call.1} parent=43 // pred_check_branch
          %257 = sbr.rel (%p255) target = $region48
        $region47: #{tpu_custom_call.1} parent=43 // pred_region
          %s258 = sand.u32 %s110, 1
          %s259 = scalar_lea.sflag [#allocation4], %s258
          %s260 = sand.u32 %s110, 1
          %s261 = smul.addr %s260, 4
          %s262 = scalar_lea.vmem [#allocation7], %s261
          %263 = dma.done %s259, 64
        $region48: #{tpu_custom_call.1} parent=43 // pred_fallthru
          _
      $region44: #{tpu_custom_call.1} parent=5 // pred_fallthru
        _
    $region6: #{tpu_custom_call.1} parent=1 // loop_footer
      %s19 = sadd.s32 1, %s15
    $region7: #{tpu_custom_call.1} parent=1 // loop_footer_branch
      %14 = sbr.rel target = $region3
    $region8: #{tpu_custom_call.1} parent=1 // loop_exit
      _
    %264 = vsyncpa [#allocation3], 1
    %s265 = scalar_lea.sflag [#allocation3], 1
    %266 = vsyncpa %s265, 1
    %267 = vsyncpa [#allocation6], 1
    %268 = vsyncpa [#allocation4], 1
    %s269 = scalar_lea.sflag [#allocation4], 1
    %270 = vsyncpa %s269, 1

</llo_original>
